<compile_context>
chip_gen: v5e
topology: v5e:2x2
jax: 0.10.0
libtpu: 0.0.40
codegen_flags: <defaults>
</compile_context>

<pallas_src>
import functools
import random

import jax
import jax.numpy as jnp
from jax.experimental import pallas as pl
from jax.experimental.pallas import tpu as pltpu

_HP = jax.lax.Precision.HIGHEST


def _fused_kernel(x_ref, w_ref, b_ref, o_ref):
    # x_ref: [TILE_M, H], w_ref: [H, H], b_ref: [1, H], o_ref: [TILE_M, H]
    acc = jnp.dot(
        x_ref[...],
        w_ref[...],
        preferred_element_type=jnp.float32,
        precision=_HP,
    )
    o_ref[...] = (acc + b_ref[...]).astype(o_ref.dtype)


def _choose_tile_m(m: int, hidden: int, dtype_bytes: int = 4) -> int:
    """M-tile such that double-buffered in+out tiles + resident [H,H] weight
    stay well inside VMEM on every generation (v7x is the tightest)."""
    budget = 24 * 1024 * 1024  # conservative working budget
    weight_bytes = 2 * (hidden * hidden + 2 * hidden) * dtype_bytes
    avail = max(budget - weight_bytes, 1 * 1024 * 1024)
    per_row = 2 * 2 * hidden * dtype_bytes  # (in + out) x double-buffer
    tile = int(avail // per_row)
    tile = max(8, min(tile, 1024))
    tile -= tile % 8  # sublane alignment
    m_rounded = ((m + 7) // 8) * 8
    return max(8, min(tile, m_rounded))


@functools.partial(jax.jit, static_argnums=(6,))
def genomic_bottleneck_forward(
    x, left_w, left_b, active_genome, right_w, right_b, residual_idx
):
    """Pallas implementation of GenomicBottleneck.forward (eval mode).

    Args:
      x: [batch, seq, hidden] float32.
      left_w: [genome_dim, quarter]  (PyTorch nn.Linear weight layout).
      left_b: [genome_dim].
      active_genome: [genome_dim, genome_dim].
      right_w: [quarter, genome_dim] (PyTorch nn.Linear weight layout).
      right_b: [quarter].
      residual_idx: which of the 4 splits bypasses the bottleneck (static int).
    """
    batch, seq, hidden = x.shape
    quarter = hidden // 4
    m = batch * seq

    # ---- Host-side fusion of the three linears -----------------------------
    # F.linear chain: out = ((x @ Wl^T + bl) @ G^T) @ Wr^T + br
    #               = x @ (Wl^T G^T Wr^T) + (bl G^T Wr^T + br)
    wl_t = jnp.transpose(left_w)          # [q, g]
    g_t = jnp.transpose(active_genome)    # [g, g]
    wr_t = jnp.transpose(right_w)         # [g, q]
    w_comb = jnp.dot(jnp.dot(wl_t, g_t, precision=_HP), wr_t, precision=_HP)
    b_comb = (
        jnp.dot(jnp.dot(left_b.reshape(1, -1), g_t, precision=_HP),
                wr_t, precision=_HP)
        + right_b.reshape(1, -1)
    )  # [1, q]

    # ---- Block-diagonal [H, H] weight: identity block for the residual -----
    w_full = jnp.zeros((hidden, hidden), dtype=jnp.float32)
    b_full = jnp.zeros((1, hidden), dtype=jnp.float32)
    eye_q = jnp.eye(quarter, dtype=jnp.float32)
    for i in range(4):
        sl = slice(i * quarter, (i + 1) * quarter)
        if i == residual_idx:
            w_full = w_full.at[sl, sl].set(eye_q)
        else:
            w_full = w_full.at[sl, sl].set(w_comb)
            b_full = b_full.at[:, sl].set(b_comb)

    # ---- Lane-dense [M, H] layout, tiled over M -----------------------------
    x2 = x.reshape(m, hidden)
    tile_m = _choose_tile_m(m, hidden)
    m_pad = ((m + tile_m - 1) // tile_m) * tile_m
    if m_pad != m:
        x2 = jnp.pad(x2, ((0, m_pad - m), (0, 0)))

    est_vmem = (2 * (hidden * hidden + 2 * hidden) + 4 * tile_m * hidden) * 4
    vmem_limit = int(min(48 * 1024 * 1024, max(16 * 1024 * 1024, 2 * est_vmem)))

    out = pl.pallas_call(
        _fused_kernel,
        out_shape=jax.ShapeDtypeStruct((m_pad, hidden), x.dtype),
        grid=(m_pad // tile_m,),
        in_specs=[
            pl.BlockSpec((tile_m, hidden), lambda i: (i, 0)),   # x tile
            pl.BlockSpec((hidden, hidden), lambda i: (0, 0)),   # fused weight
            pl.BlockSpec((1, hidden), lambda i: (0, 0)),        # fused bias
        ],
        out_specs=pl.BlockSpec((tile_m, hidden), lambda i: (i, 0)),
        compiler_params=pltpu.CompilerParams(
            dimension_semantics=("parallel",),
            vmem_limit_bytes=vmem_limit,
        ),
    )(x2, w_full, b_full)

    return out[:m].reshape(batch, seq, hidden)


def _reference_forward(
    x, left_w, left_b, active_genome, right_w, right_b, residual_idx
):
    """Pure-JAX reference mirroring the PyTorch forward (unfused)."""
    hidden = x.shape[-1]
    quarter = hidden // 4
    splits = [x[..., i * quarter:(i + 1) * quarter] for i in range(4)]
    outs = []
    for i in range(4):
        if i == residual_idx:
            outs.append(splits[i])
        else:
            proj = jnp.dot(splits[i], left_w.T, precision=_HP) + left_b
            bott = jnp.dot(proj, active_genome.T, precision=_HP)
            out = jnp.dot(bott, right_w.T, precision=_HP) + right_b
            outs.append(out)
    return jnp.concatenate(outs, axis=-1)


if __name__ == "__main__":
    # Small shapes consistent with the module: hidden_size=32 -> quarter=8.
    batch, seq, hidden = 2, 8, 32
    genome_dim = 23
    population_size = 64
    quarter = hidden // 4

    key = jax.random.PRNGKey(0)
    k_x, k_lw, k_lb, k_pop, k_rw, k_rb = jax.random.split(key, 6)

    x = jax.random.normal(k_x, (batch, seq, hidden), dtype=jnp.float32)

    bound_l = 1.0 / (quarter ** 0.5)
    left_w = jax.random.uniform(
        k_lw, (genome_dim, quarter), minval=-bound_l, maxval=bound_l
    ).astype(jnp.float32)
    left_b = jax.random.uniform(
        k_lb, (genome_dim,), minval=-bound_l, maxval=bound_l
    ).astype(jnp.float32)

    bound_r = 1.0 / (genome_dim ** 0.5)
    right_w = jax.random.uniform(
        k_rw, (quarter, genome_dim), minval=-bound_r, maxval=bound_r
    ).astype(jnp.float32)
    right_b = jax.random.uniform(
        k_rb, (quarter,), minval=-bound_r, maxval=bound_r
    ).astype(jnp.float32)

    population = (
        jax.random.normal(k_pop, (population_size, genome_dim, genome_dim)) * 0.02
    ).astype(jnp.float32)
    active_genome = population[0]

    # Residual split index: random.choice in the PyTorch module; seeded here.
    random.seed(0)
    residual_idx = random.choice([0, 1, 2, 3])

    y = genomic_bottleneck_forward(
        x, left_w, left_b, active_genome, right_w, right_b, residual_idx
    )
    y = jax.block_until_ready(y)

    y_ref = _reference_forward(
        x, left_w, left_b, active_genome, right_w, right_b, residual_idx
    )
    assert y.shape == x.shape and y.dtype == x.dtype
    assert jnp.allclose(y, y_ref, atol=1e-5, rtol=1e-5), (
        float(jnp.max(jnp.abs(y - y_ref)))
    )

    print("KERNEL_OK")
</pallas_src>

<mosaic_0001>
module attributes {stable_mosaic.version = 11 : i64} {
  func.func @_fused_kernel(%arg0: i32, %arg1: memref<16x32xf32, #tpu.memory_space<vmem>>, %arg2: memref<32x32xf32, #tpu.memory_space<vmem>>, %arg3: memref<1x32xf32, #tpu.memory_space<vmem>>, %arg4: memref<16x32xf32, #tpu.memory_space<vmem>>) attributes {dimension_semantics = [#tpu.dimension_semantics<parallel>], iteration_bounds = array<i64: 1>, scalar_prefetch = 0 : i64, scratch_operands = 0 : i64, tpu.core_type = #tpu.core_type<tc>, window_params = [{transform_indices = @transform_0, window_bounds = array<i64: 16, 32>}, {pipeline_mode = #tpu.pipeline_mode<synchronous>, transform_indices = @transform_1, window_bounds = array<i64: 32, 32>}, {pipeline_mode = #tpu.pipeline_mode<synchronous>, transform_indices = @transform_2, window_bounds = array<i64: 1, 32>}, {transform_indices = @transform_3, window_bounds = array<i64: 16, 32>}]} {
    %c0 = arith.constant 0 : index
    %c0_0 = arith.constant 0 : index
    %0 = vector.load %arg1[%c0, %c0_0] : memref<16x32xf32, #tpu.memory_space<vmem>>, vector<16x32xf32>
    %c0_1 = arith.constant 0 : index
    %c0_2 = arith.constant 0 : index
    %1 = vector.load %arg2[%c0_1, %c0_2] : memref<32x32xf32, #tpu.memory_space<vmem>>, vector<32x32xf32>
    %cst = arith.constant dense<0.000000e+00> : vector<16x32xf32>
    %2 = tpu.matmul %0, %1, %cst {dimension_numbers = #tpu.dot_dimension_numbers<[1], [0], [0], [1], [0, 0, 1, 1], [], []>, precision = #tpu.contract_precision<fp32>} : vector<16x32xf32>, vector<32x32xf32>, vector<16x32xf32> -> vector<16x32xf32>
    %c0_3 = arith.constant 0 : index
    %c0_4 = arith.constant 0 : index
    %3 = vector.load %arg3[%c0_3, %c0_4] : memref<1x32xf32, #tpu.memory_space<vmem>>, vector<1x32xf32>
    %4 = vector.broadcast %3 : vector<1x32xf32> to vector<16x32xf32>
    %5 = arith.addf %2, %4 : vector<16x32xf32>
    %c0_5 = arith.constant 0 : index
    %c0_6 = arith.constant 0 : index
    %6 = vector.load %arg4[%c0_5, %c0_6] : memref<16x32xf32, #tpu.memory_space<vmem>>, vector<16x32xf32>
    tpu.vector_store %arg4[%c0_5, %c0_6], %5 {strides = array<i32>} : memref<16x32xf32, #tpu.memory_space<vmem>>, vector<16x32xf32>,
    return
  }
  func.func @transform_0(%arg0: i32) -> (i32, i32) {
    %c0_i32 = arith.constant 0 : i32
    %c0_i32_0 = arith.constant 0 : i32
    return %arg0, %c0_i32 : i32, i32
  }
  func.func @transform_1(%arg0: i32) -> (i32, i32) {
    %c0_i32 = arith.constant 0 : i32
    %c0_i32_0 = arith.constant 0 : i32
    %c0_i32_1 = arith.constant 0 : i32
    return %c0_i32, %c0_i32_0 : i32, i32
  }
  func.func @transform_2(%arg0: i32) -> (i32, i32) {
    %c0_i32 = arith.constant 0 : i32
    %c0_i32_0 = arith.constant 0 : i32
    %c0_i32_1 = arith.constant 0 : i32
    return %c0_i32, %c0_i32_0 : i32, i32
  }
  func.func @transform_3(%arg0: i32) -> (i32, i32) {
    %c0_i32 = arith.constant 0 : i32
    %c0_i32_0 = arith.constant 0 : i32
    return %arg0, %c0_i32 : i32, i32
  }
}

</mosaic_0001>

<llo_original>
// kernel: genomic_bottleneck_forward.1
$region0: #{genomic_bottleneck_forward.1}
  #allocation0 [shape = 'u32[]', space=smem, size = 0x4, offset = 0x4, fixed_abs, tag = 'smem constant byte address 0x4 - core index']
  #allocation1 [shape = 'u32[72,128]{1,0:T(1,128)}', space=vmem, size = 0x9000, scoped, tag = 'internal scratch']
  %s0 = inlined_call_operand.vmem [shape: f32[16,32], index: 0, kind: input, shape index: {}]
  %s1 = inlined_call_operand.vmem [shape: f32[32,32], index: 1, kind: input, shape index: {}]
  %s2 = inlined_call_operand.vmem [shape: f32[1,32], index: 2, kind: input, shape index: {}]
  %s3 = inlined_call_operand.hbm [shape: f32[16,32], index: 3, kind: output, shape index: {}]
  %s4 = sld [smem:[#allocation0]]
  $region22: #{genomic_bottleneck_forward.1} parent=0
    _
  %s6 = ssub.s32 1, %s4
  %s7 = scalar_select 0, %s6, %s4
  $region1: #{genomic_bottleneck_forward.1} parent=0
    #allocation2 [shape = 'u8[8192]{0}', space=vmem, size = 0x2000, scoped, tag = 'output window, operand 0, single buffered']
    #allocation3 [shape = 's32[1]{0}', space=sflag, size = 0x4, scoped, tag = 'scoped memory for genomic_bottleneck_forward.1']
    %8 = vsyncpa [#allocation3], 0
    // Predicated region
    $region2: #{genomic_bottleneck_forward.1} parent=1 // pred_check
      _
    $region3: #{genomic_bottleneck_forward.1} parent=1 // pred_check_branch
      %10 = sbr.rel (0) target = $region5
    $region4: #{genomic_bottleneck_forward.1} parent=1 // pred_region
      _
    $region5: #{genomic_bottleneck_forward.1} parent=1 // pred_fallthru
      _
    // Predicated region
    $region6: #{genomic_bottleneck_forward.1} parent=1 // pred_check
      _
    $region7: #{genomic_bottleneck_forward.1} parent=1 // pred_check_branch
      %12 = sbr.rel (0) target = $region9
    $region8: #{genomic_bottleneck_forward.1} parent=1 // pred_region
      _
    $region9: #{genomic_bottleneck_forward.1} parent=1 // pred_fallthru
      _
    // Predicated region
    $region10: #{genomic_bottleneck_forward.1} parent=1 // pred_check
      _
    $region11: #{genomic_bottleneck_forward.1} parent=1 // pred_check_branch
      %14 = sbr.rel (0) target = $region13
    $region12: #{genomic_bottleneck_forward.1} parent=1 // pred_region
      _
    $region13: #{genomic_bottleneck_forward.1} parent=1 // pred_fallthru
      _
    %v15 = vld [vmem:[%s0] sm:$0xff]
    %v16 = vld [vmem:[%s0 + $0x8] sm:$0xff]
    %v17 = vld [vmem:[%s1] sm:$0xff]
    %v18 = vld [vmem:[%s1 + $0x8] sm:$0xff]
    %v19 = vld [vmem:[%s1 + $0x10] sm:$0xff]
    %v20 = vld [vmem:[%s1 + $0x18] sm:$0xff]
    %v21 = vld [vmem:[%s2] sm:$0x1]
    %v23 = vperm.slane %v21, 0
    %vm25 = vcmask 261120
    %v27 = vsel %vm25, %v15, 0
    %v30 = vsel %vm25, %v16, 0
    %32 = vmatpush.msra.mxu0 0.0
    %33 = vmatpush.msra.mxu0 0.0
    %34 = vmatpush.msra.mxu0 0.0
    %35 = vmatpush.msra.mxu0 0.0
    %36 = vmatpush.msra.mxu0 0.0
    %37 = vmatpush.msra.mxu0 0.0
    %38 = vmatpush.msra.mxu0 0.0
    %39 = vmatpush.msra.mxu0 0.0
    %40 = vmatpush.msra.mxu0 0.0
    %41 = vmatpush.msra.mxu0 0.0
    %42 = vmatpush.msra.mxu0 0.0
    %43 = vmatpush.msra.mxu0 0.0
    %v44 = vand.u32 %v20, 4294901760
    %45 = vmatpush.msra.mxu0 %v44
    %v46 = vand.u32 %v19, 4294901760
    %47 = vmatpush.msra.mxu0 %v46
    %v48 = vand.u32 %v18, 4294901760
    %49 = vmatpush.msra.mxu0 %v48
    %v50 = vand.u32 %v17, 4294901760
    %51 = vmatpush.msra.mxu0 %v50
    %v52 = vand.u32 %v27, 4294901760
    %v53 = vsub.f32 %v27, %v52
    %v54 = vand.u32 %v53, 4294901760
    %v55 = vsub.f32 %v53, %v54
    %v56 = vand.u32 %v55, 4294901760
    %57 = vmatmul.f32.gmra.mxu0 %v56
    %v58 = vpop.f32.mrf.mxu0
    %v59 = vadd.f32 %v23, %v58
    %v60 = vand.u32 %v30, 4294901760
    %v61 = vsub.f32 %v30, %v60
    %v62 = vand.u32 %v61, 4294901760
    %v63 = vsub.f32 %v61, %v62
    %v64 = vand.u32 %v63, 4294901760
    %65 = vmatmul.f32.gmra.mxu0 %v64
    %v66 = vpop.f32.mrf.mxu0
    %v67 = vadd.f32 %v23, %v66
    %68 = vdwg.mxu0
    %69 = vmatpush.msra.mxu0 0.0
    %70 = vmatpush.msra.mxu0 0.0
    %71 = vmatpush.msra.mxu0 0.0
    %72 = vmatpush.msra.mxu0 0.0
    %73 = vmatpush.msra.mxu0 0.0
    %74 = vmatpush.msra.mxu0 0.0
    %75 = vmatpush.msra.mxu0 0.0
    %76 = vmatpush.msra.mxu0 0.0
    %77 = vmatpush.msra.mxu0 0.0
    %78 = vmatpush.msra.mxu0 0.0
    %79 = vmatpush.msra.mxu0 0.0
    %80 = vmatpush.msra.mxu0 0.0
    %v81 = vand.u32 %v20, 4294901760
    %v82 = vsub.f32 %v20, %v81
    %v83 = vand.u32 %v82, 4294901760
    %v84 = vsub.f32 %v82, %v83
    %v85 = vand.u32 %v84, 4294901760
    %86 = vmatpush.msra.mxu0 %v85
    %v87 = vand.u32 %v19, 4294901760
    %v88 = vsub.f32 %v19, %v87
    %v89 = vand.u32 %v88, 4294901760
    %v90 = vsub.f32 %v88, %v89
    %v91 = vand.u32 %v90, 4294901760
    %92 = vmatpush.msra.mxu0 %v91
    %v93 = vand.u32 %v18, 4294901760
    %v94 = vsub.f32 %v18, %v93
    %v95 = vand.u32 %v94, 4294901760
    %v96 = vsub.f32 %v94, %v95
    %v97 = vand.u32 %v96, 4294901760
    %98 = vmatpush.msra.mxu0 %v97
    %v99 = vand.u32 %v17, 4294901760
    %v100 = vsub.f32 %v17, %v99
    %v101 = vand.u32 %v100, 4294901760
    %v102 = vsub.f32 %v100, %v101
    %v103 = vand.u32 %v102, 4294901760
    %104 = vmatpush.msra.mxu0 %v103
    %v105 = vand.u32 %v27, 4294901760
    %106 = vmatmul.f32.gmra.mxu0 %v105
    %v107 = vpop.f32.mrf.mxu0
    %v108 = vadd.f32 %v59, %v107
    %v109 = vand.u32 %v30, 4294901760
    %110 = vmatmul.f32.gmra.mxu0 %v109
    %v111 = vpop.f32.mrf.mxu0
    %v112 = vadd.f32 %v67, %v111
    %113 = vdwg.mxu0
    %114 = vmatpush.msra.mxu0 0.0
    %115 = vmatpush.msra.mxu0 0.0
    %116 = vmatpush.msra.mxu0 0.0
    %117 = vmatpush.msra.mxu0 0.0
    %118 = vmatpush.msra.mxu0 0.0
    %119 = vmatpush.msra.mxu0 0.0
    %120 = vmatpush.msra.mxu0 0.0
    %121 = vmatpush.msra.mxu0 0.0
    %122 = vmatpush.msra.mxu0 0.0
    %123 = vmatpush.msra.mxu0 0.0
    %124 = vmatpush.msra.mxu0 0.0
    %125 = vmatpush.msra.mxu0 0.0
    %v126 = vand.u32 %v20, 4294901760
    %v127 = vsub.f32 %v20, %v126
    %128 = vmatpush.msra.mxu0 %v127
    %v129 = vand.u32 %v19, 4294901760
    %v130 = vsub.f32 %v19, %v129
    %131 = vmatpush.msra.mxu0 %v130
    %v132 = vand.u32 %v18, 4294901760
    %v133 = vsub.f32 %v18, %v132
    %134 = vmatpush.msra.mxu0 %v133
    %v135 = vand.u32 %v17, 4294901760
    %v136 = vsub.f32 %v17, %v135
    %137 = vmatpush.msra.mxu0 %v136
    %v138 = vand.u32 %v27, 4294901760
    %v139 = vsub.f32 %v27, %v138
    %140 = vmatmul.f32.gmra.mxu0 %v139
    %v141 = vpop.f32.mrf.mxu0
    %v142 = vadd.f32 %v108, %v141
    %v143 = vand.u32 %v30, 4294901760
    %v144 = vsub.f32 %v30, %v143
    %145 = vmatmul.f32.gmra.mxu0 %v144
    %v146 = vpop.f32.mrf.mxu0
    %v147 = vadd.f32 %v112, %v146
    %148 = vdwg.mxu0
    %149 = vmatpush.msra.mxu0 0.0
    %150 = vmatpush.msra.mxu0 0.0
    %151 = vmatpush.msra.mxu0 0.0
    %152 = vmatpush.msra.mxu0 0.0
    %153 = vmatpush.msra.mxu0 0.0
    %154 = vmatpush.msra.mxu0 0.0
    %155 = vmatpush.msra.mxu0 0.0
    %156 = vmatpush.msra.mxu0 0.0
    %157 = vmatpush.msra.mxu0 0.0
    %158 = vmatpush.msra.mxu0 0.0
    %159 = vmatpush.msra.mxu0 0.0
    %160 = vmatpush.msra.mxu0 0.0
    %v161 = vand.u32 %v20, 4294901760
    %162 = vmatpush.msra.mxu0 %v161
    %v163 = vand.u32 %v19, 4294901760
    %164 = vmatpush.msra.mxu0 %v163
    %v165 = vand.u32 %v18, 4294901760
    %166 = vmatpush.msra.mxu0 %v165
    %v167 = vand.u32 %v17, 4294901760
    %168 = vmatpush.msra.mxu0 %v167
    %v169 = vand.u32 %v27, 4294901760
    %v170 = vsub.f32 %v27, %v169
    %v171 = vand.u32 %v170, 4294901760
    %172 = vmatmul.f32.gmra.mxu0 %v171
    %v173 = vpop.f32.mrf.mxu0
    %v174 = vadd.f32 %v142, %v173
    %v175 = vand.u32 %v30, 4294901760
    %v176 = vsub.f32 %v30, %v175
    %v177 = vand.u32 %v176, 4294901760
    %178 = vmatmul.f32.gmra.mxu0 %v177
    %v179 = vpop.f32.mrf.mxu0
    %v180 = vadd.f32 %v147, %v179
    %181 = vdwg.mxu0
    %182 = vmatpush.msra.mxu0 0.0
    %183 = vmatpush.msra.mxu0 0.0
    %184 = vmatpush.msra.mxu0 0.0
    %185 = vmatpush.msra.mxu0 0.0
    %186 = vmatpush.msra.mxu0 0.0
    %187 = vmatpush.msra.mxu0 0.0
    %188 = vmatpush.msra.mxu0 0.0
    %189 = vmatpush.msra.mxu0 0.0
    %190 = vmatpush.msra.mxu0 0.0
    %191 = vmatpush.msra.mxu0 0.0
    %192 = vmatpush.msra.mxu0 0.0
    %193 = vmatpush.msra.mxu0 0.0
    %v194 = vand.u32 %v20, 4294901760
    %v195 = vsub.f32 %v20, %v194
    %v196 = vand.u32 %v195, 4294901760
    %197 = vmatpush.msra.mxu0 %v196
    %v198 = vand.u32 %v19, 4294901760
    %v199 = vsub.f32 %v19, %v198
    %v200 = vand.u32 %v199, 4294901760
    %201 = vmatpush.msra.mxu0 %v200
    %v202 = vand.u32 %v18, 4294901760
    %v203 = vsub.f32 %v18, %v202
    %v204 = vand.u32 %v203, 4294901760
    %205 = vmatpush.msra.mxu0 %v204
    %v206 = vand.u32 %v17, 4294901760
    %v207 = vsub.f32 %v17, %v206
    %v208 = vand.u32 %v207, 4294901760
    %209 = vmatpush.msra.mxu0 %v208
    %v210 = vand.u32 %v27, 4294901760
    %211 = vmatmul.f32.gmra.mxu0 %v210
    %v212 = vpop.f32.mrf.mxu0
    %v213 = vadd.f32 %v174, %v212
    %v214 = vand.u32 %v30, 4294901760
    %215 = vmatmul.f32.gmra.mxu0 %v214
    %v216 = vpop.f32.mrf.mxu0
    %v217 = vadd.f32 %v180, %v216
    %218 = vdwg.mxu0
    %219 = vmatpush.msra.mxu0 0.0
    %220 = vmatpush.msra.mxu0 0.0
    %221 = vmatpush.msra.mxu0 0.0
    %222 = vmatpush.msra.mxu0 0.0
    %223 = vmatpush.msra.mxu0 0.0
    %224 = vmatpush.msra.mxu0 0.0
    %225 = vmatpush.msra.mxu0 0.0
    %226 = vmatpush.msra.mxu0 0.0
    %227 = vmatpush.msra.mxu0 0.0
    %228 = vmatpush.msra.mxu0 0.0
    %229 = vmatpush.msra.mxu0 0.0
    %230 = vmatpush.msra.mxu0 0.0
    %v231 = vand.u32 %v20, 4294901760
    %232 = vmatpush.msra.mxu0 %v231
    %v233 = vand.u32 %v19, 4294901760
    %234 = vmatpush.msra.mxu0 %v233
    %v235 = vand.u32 %v18, 4294901760
    %236 = vmatpush.msra.mxu0 %v235
    %v237 = vand.u32 %v17, 4294901760
    %238 = vmatpush.msra.mxu0 %v237
    %v239 = vand.u32 %v27, 4294901760
    %240 = vmatmul.f32.gmra.mxu0 %v239
    %v241 = vpop.f32.mrf.mxu0
    %v242 = vadd.f32 %v213, %v241
    %v243 = vand.u32 %v30, 4294901760
    %244 = vmatmul.f32.gmra.mxu0 %v243
    %v245 = vpop.f32.mrf.mxu0
    %v246 = vadd.f32 %v217, %v245
    %247 = vdwg.mxu0
    %248 = vst.msk [vmem:[#allocation2] sm:$0xff] %vm25, %v242
    %249 = vst.msk [vmem:[#allocation2 + $0x8] sm:$0xff] %vm25, %v246
    // Predicated region
    $region14: #{genomic_bottleneck_forward.1} parent=1 // pred_check
      _
    $region15: #{genomic_bottleneck_forward.1} parent=1 // pred_check_branch
      %251 = sbr.rel (0) target = $region17
    $region16: #{genomic_bottleneck_forward.1} parent=1 // pred_region
      %253 = vsyncadd [#allocation3], 0
      %s254 = sshll.u32 [#allocation2], 4
      %s255 = int_to_ptr.vmem [resolvable:$true] %s254
      %s256 = sshll.u32 %s3, 4
      %s257 = int_to_ptr.hbm [resolvable:$true] %s256
      %262 = dma.vmem_to_hbm [thread:$0]  %s255, 256, %s257, [#allocation3], 128, 128, 8
    $region17: #{genomic_bottleneck_forward.1} parent=1 // pred_fallthru
      _
    // Predicated region
    $region18: #{genomic_bottleneck_forward.1} parent=1 // pred_check
      _
    $region19: #{genomic_bottleneck_forward.1} parent=1 // pred_check_branch
      %264 = sbr.rel (0) target = $region21
    $region20: #{genomic_bottleneck_forward.1} parent=1 // pred_region
      %266 = dma.done [#allocation3], 256
    $region21: #{genomic_bottleneck_forward.1} parent=1 // pred_fallthru
      _
    %267 = vsyncpa [#allocation3], 1

</llo_original>
